<compile_context>
chip_gen: v6e
topology: v6e:2x2x1
jax: 0.10.0
libtpu: 0.0.40
codegen_flags: <defaults>
</compile_context>

<pallas_src>
import math

import jax
import jax.numpy as jnp
from jax.experimental import pallas as pl
from jax.experimental.pallas import tpu as pltpu


# ----------------------------- helpers -------------------------------------


def _round_up(x, m):
    return ((x + m - 1) // m) * m


def _pad2d(x, rows, cols):
    r, c = x.shape
    if r == rows and c == cols:
        return x
    return jnp.pad(x, ((0, rows - r), (0, cols - c)))


# ----------------------------- Pallas kernel --------------------------------


def _matmul_bias_kernel(a_ref, b_ref, bias_ref, o_ref, acc_ref):
    """o = a @ b + bias, accumulated over the K grid axis (axis 2)."""
    k = pl.program_id(2)

    @pl.when(k == 0)
    def _init():
        acc_ref[...] = jnp.zeros_like(acc_ref)

    acc_ref[...] += jnp.dot(
        a_ref[...], b_ref[...], preferred_element_type=jnp.float32
    )

    @pl.when(k == pl.num_programs(2) - 1)
    def _finalize():
        o_ref[...] = (acc_ref[...] + bias_ref[...]).astype(o_ref.dtype)


def pallas_matmul_bias(a, b, bias=None, *, tm_max=256, tk_max=512, tn_max=512):
    """Tiled Pallas matmul:  out = a @ b (+ bias),  f32 in / f32 out.

    a: [M, K], b: [K, N], bias: [N] or None.  Operands are zero-padded to
    sublane/lane friendly tile multiples and cast to bf16 (f32 MXU
    accumulation); result is sliced back to [M, N].
    """
    M, K = a.shape
    K2, N = b.shape
    assert K == K2, (a.shape, b.shape)

    tm = min(tm_max, _round_up(M, 8))      # sublane-aligned row tile
    tk = min(tk_max, _round_up(K, 128))    # lane-aligned contraction tile
    tn = min(tn_max, _round_up(N, 128))    # lane-dense output tile
    Mp, Kp, Np = _round_up(M, tm), _round_up(K, tk), _round_up(N, tn)

    a_p = _pad2d(a.astype(jnp.float32), Mp, Kp).astype(jnp.bfloat16)
    b_p = _pad2d(b.astype(jnp.float32), Kp, Np).astype(jnp.bfloat16)
    if bias is None:
        bias_p = jnp.zeros((1, Np), jnp.float32)
    else:
        bias_p = _pad2d(bias.reshape(1, N).astype(jnp.float32), 1, Np)

    grid = (Mp // tm, Np // tn, Kp // tk)

    cost = pl.CostEstimate(
        flops=2 * Mp * Kp * Np,
        transcendentals=0,
        bytes_accessed=a_p.size * 2 + b_p.size * 2 + bias_p.size * 4 + Mp * Np * 4,
    )

    out = pl.pallas_call(
        _matmul_bias_kernel,
        out_shape=jax.ShapeDtypeStruct((Mp, Np), jnp.float32),
        grid_spec=pltpu.PrefetchScalarGridSpec(
            num_scalar_prefetch=0,
            grid=grid,
            in_specs=[
                pl.BlockSpec((tm, tk), lambda i, j, k: (i, k)),
                pl.BlockSpec((tk, tn), lambda i, j, k: (k, j)),
                pl.BlockSpec((1, tn), lambda i, j, k: (0, j)),
            ],
            out_specs=pl.BlockSpec((tm, tn), lambda i, j, k: (i, j)),
            scratch_shapes=[pltpu.VMEM((tm, tn), jnp.float32)],
        ),
        compiler_params=pltpu.CompilerParams(
            dimension_semantics=("parallel", "parallel", "arbitrary"),
            vmem_limit_bytes=48 * 1024 * 1024,   # fits v7x's 64 MiB VMEM with headroom
        ),
        cost_estimate=cost,
    )(a_p, b_p, bias_p)

    return out[:M, :N]


# ----------------------------- GCN layer & GraphFunc ------------------------


def graph_convolution(x, adj, weight, bias):
    """output = adj @ (x @ weight) + bias (GraphConvolution.forward)."""
    # support = x @ W is hoisted into its own (single) kernel call so the
    # adj-tiled second matmul never recomputes it.
    support = pallas_matmul_bias(x, weight, bias=None)
    return pallas_matmul_bias(adj, support, bias=bias)


def graph_normalize(mx):
    """D^{-1/2} @ mx @ D^{-1/2} with inf -> 0 guard (matches the PyTorch code)."""
    rowsum = jnp.sum(mx, axis=1)
    r_inv = jnp.power(rowsum, -0.5)
    r_inv = jnp.where(jnp.isinf(r_inv), jnp.zeros_like(r_inv), r_inv)
    return mx * r_inv[:, None] * r_inv[None, :]


def build_adjacency(way, querynum):
    graph_dim = way + querynum * way
    sim = jnp.ones((way, querynum * way), jnp.float32)
    adj = jnp.zeros((graph_dim, graph_dim), jnp.float32)
    adj = adj.at[:way, way:].set(sim)
    adj = adj.at[way:, :way].set(sim.T)
    adj = adj.at[:way, :way].set(jnp.ones((way, way), jnp.float32))
    return graph_normalize(adj + jnp.eye(graph_dim, dtype=jnp.float32))


def graphfunc_forward(support, query, params, *, way, querynum):
    """Full GraphFunc.forward (training-path way/query settings)."""
    w1, b1, w2, b2 = params
    support = jnp.squeeze(support, axis=0)           # [shot, way, z]
    query = jnp.squeeze(query, axis=0)               # [querynum*way, z]
    support_proto = jnp.mean(support, axis=0)        # [way, z]

    adjm = build_adjacency(way, querynum)            # [graph_dim, graph_dim]
    graph_in = jnp.concatenate([support_proto, query], axis=0)   # [graph_dim, z]

    # transfunc: relu(gc1(.)) -> gc2(.) + residual
    h = jax.nn.relu(graph_convolution(graph_in, adjm, w1, b1))
    graph_out = graph_convolution(h, adjm, w2, b2) + graph_in

    return jnp.mean(graph_out[way:], axis=0)         # [z]


def init_params(key, z_dim):
    """Mirror reset_parameters(): U(-stdv, stdv), stdv = 1/sqrt(out_features)."""
    def _layer(k, in_f, out_f):
        stdv = 1.0 / math.sqrt(out_f)
        kw, kb = jax.random.split(k)
        w = jax.random.uniform(kw, (in_f, out_f), jnp.float32, -stdv, stdv)
        b = jax.random.uniform(kb, (out_f,), jnp.float32, -stdv, stdv)
        return w, b

    k1, k2 = jax.random.split(key)
    w1, b1 = _layer(k1, z_dim, 2 * z_dim)
    w2, b2 = _layer(k2, 2 * z_dim, z_dim)
    return w1, b1, w2, b2


# ----------------------------- reference (pure JAX) --------------------------


def _bf16_round(x):
    return x.astype(jnp.bfloat16).astype(jnp.float32)


def _ref_matmul(a, b):
    # Emulates the kernel numerics: bf16 operands, f32 accumulation.
    return jnp.dot(_bf16_round(a), _bf16_round(b),
                   precision=jax.lax.Precision.HIGHEST)


def _ref_gcn(x, adj, w, bias):
    return _ref_matmul(adj, _ref_matmul(x, w)) + bias


def graphfunc_reference(support, query, params, *, way, querynum):
    w1, b1, w2, b2 = params
    support = jnp.squeeze(support, axis=0)
    query = jnp.squeeze(query, axis=0)
    support_proto = jnp.mean(support, axis=0)
    adjm = build_adjacency(way, querynum)
    graph_in = jnp.concatenate([support_proto, query], axis=0)
    h = jax.nn.relu(_ref_gcn(graph_in, adjm, w1, b1))
    graph_out = _ref_gcn(h, adjm, w2, b2) + graph_in
    return jnp.mean(graph_out[way:], axis=0)


# ----------------------------- demo / check ---------------------------------


if __name__ == "__main__":
    key = jax.random.PRNGKey(0)
    k_s, k_q, k_p = jax.random.split(key, 3)

    Z_DIM = 32
    WAY, SHOT, QUERY = 5, 5, 15          # graph_dim = way + query*way = 80

    support = jax.random.normal(k_s, (1, SHOT, WAY, Z_DIM), jnp.float32)
    query = jax.random.normal(k_q, (1, QUERY * WAY, Z_DIM), jnp.float32)
    params = init_params(k_p, Z_DIM)

    out = graphfunc_forward(support, query, params, way=WAY, querynum=QUERY)
    out = jax.block_until_ready(out)

    ref = graphfunc_reference(support, query, params, way=WAY, querynum=QUERY)

    assert out.shape == (Z_DIM,), out.shape
    assert jnp.allclose(out, ref, atol=2e-3, rtol=2e-3), (
        "mismatch vs reference",
        float(jnp.max(jnp.abs(out - ref))),
    )

    print("KERNEL_OK")
</pallas_src>

<mosaic_0001>
module attributes {stable_mosaic.version = 11 : i64} {
  func.func @_matmul_bias_kernel(%arg0: i32, %arg1: i32, %arg2: i32, %arg3: memref<80x128xbf16, #tpu.memory_space<vmem>>, %arg4: memref<128x128xbf16, #tpu.memory_space<vmem>>, %arg5: memref<1x128xf32, #tpu.memory_space<vmem>>, %arg6: memref<80x128xf32, #tpu.memory_space<vmem>>, %arg7: memref<80x128xf32, #tpu.memory_space<vmem>>) attributes {dimension_semantics = [#tpu.dimension_semantics<parallel>, #tpu.dimension_semantics<parallel>, #tpu.dimension_semantics<arbitrary>], iteration_bounds = array<i64: 1, 1, 1>, scalar_prefetch = 0 : i64, scratch_operands = 1 : i64, tpu.core_type = #tpu.core_type<tc>, window_params = [{transform_indices = @transform_0, window_bounds = array<i64: 80, 128>}, {transform_indices = @transform_1, window_bounds = array<i64: 128, 128>}, {transform_indices = @transform_2, window_bounds = array<i64: 1, 128>}, {transform_indices = @transform_3, window_bounds = array<i64: 80, 128>}]} {
    %c0_i32 = arith.constant 0 : i32
    %0 = arith.cmpi eq, %arg2, %c0_i32 : i32
    %1 = arith.extui %0 : i1 to i32
    %c0_i32_0 = arith.constant 0 : i32
    %2 = arith.cmpi ne, %1, %c0_i32_0 : i32
    scf.if %2 {
      %cst_10 = arith.constant 0.000000e+00 : f32
      %12 = vector.broadcast %cst_10 : f32 to vector<80x128xf32>
      %c0_11 = arith.constant 0 : index
      %c0_12 = arith.constant 0 : index
      %13 = vector.load %arg7[%c0_11, %c0_12] : memref<80x128xf32, #tpu.memory_space<vmem>>, vector<80x128xf32>
      tpu.vector_store %arg7[%c0_11, %c0_12], %12 {strides = array<i32>} : memref<80x128xf32, #tpu.memory_space<vmem>>, vector<80x128xf32>,
    } else {
    }
    %c0 = arith.constant 0 : index
    %c0_1 = arith.constant 0 : index
    %3 = vector.load %arg7[%c0, %c0_1] : memref<80x128xf32, #tpu.memory_space<vmem>>, vector<80x128xf32>
    %c0_2 = arith.constant 0 : index
    %c0_3 = arith.constant 0 : index
    %4 = vector.load %arg3[%c0_2, %c0_3] : memref<80x128xbf16, #tpu.memory_space<vmem>>, vector<80x128xbf16>
    %c0_4 = arith.constant 0 : index
    %c0_5 = arith.constant 0 : index
    %5 = vector.load %arg4[%c0_4, %c0_5] : memref<128x128xbf16, #tpu.memory_space<vmem>>, vector<128x128xbf16>
    %cst = arith.constant dense<0.000000e+00> : vector<80x128xf32>
    %6 = tpu.matmul %4, %5, %cst {dimension_numbers = #tpu.dot_dimension_numbers<[1], [0], [0], [1], [0, 0, 1, 1], [], []>} : vector<80x128xbf16>, vector<128x128xbf16>, vector<80x128xf32> -> vector<80x128xf32>
    %7 = arith.addf %3, %6 : vector<80x128xf32>
    %c0_6 = arith.constant 0 : index
    %c0_7 = arith.constant 0 : index
    %8 = vector.load %arg7[%c0_6, %c0_7] : memref<80x128xf32, #tpu.memory_space<vmem>>, vector<80x128xf32>
    tpu.vector_store %arg7[%c0_6, %c0_7], %7 {strides = array<i32>} : memref<80x128xf32, #tpu.memory_space<vmem>>, vector<80x128xf32>,
    %c0_i32_8 = arith.constant 0 : i32
    %9 = arith.cmpi eq, %arg2, %c0_i32_8 : i32
    %10 = arith.extui %9 : i1 to i32
    %c0_i32_9 = arith.constant 0 : i32
    %11 = arith.cmpi ne, %10, %c0_i32_9 : i32
    scf.if %11 {
      %c0_10 = arith.constant 0 : index
      %c0_11 = arith.constant 0 : index
      %12 = vector.load %arg7[%c0_10, %c0_11] : memref<80x128xf32, #tpu.memory_space<vmem>>, vector<80x128xf32>
      %c0_12 = arith.constant 0 : index
      %c0_13 = arith.constant 0 : index
      %13 = vector.load %arg5[%c0_12, %c0_13] : memref<1x128xf32, #tpu.memory_space<vmem>>, vector<1x128xf32>
      %14 = vector.broadcast %13 : vector<1x128xf32> to vector<80x128xf32>
      %15 = arith.addf %12, %14 : vector<80x128xf32>
      %c0_14 = arith.constant 0 : index
      %c0_15 = arith.constant 0 : index
      %16 = vector.load %arg6[%c0_14, %c0_15] : memref<80x128xf32, #tpu.memory_space<vmem>>, vector<80x128xf32>
      tpu.vector_store %arg6[%c0_14, %c0_15], %15 {strides = array<i32>} : memref<80x128xf32, #tpu.memory_space<vmem>>, vector<80x128xf32>,
    } else {
    }
    return
  }
  func.func @transform_0(%arg0: i32, %arg1: i32, %arg2: i32) -> (i32, i32) {
    %c0_i32 = arith.constant 0 : i32
    return %arg0, %arg2 : i32, i32
  }
  func.func @transform_1(%arg0: i32, %arg1: i32, %arg2: i32) -> (i32, i32) {
    %c0_i32 = arith.constant 0 : i32
    return %arg2, %arg1 : i32, i32
  }
  func.func @transform_2(%arg0: i32, %arg1: i32, %arg2: i32) -> (i32, i32) {
    %c0_i32 = arith.constant 0 : i32
    %c0_i32_0 = arith.constant 0 : i32
    return %c0_i32, %arg1 : i32, i32
  }
  func.func @transform_3(%arg0: i32, %arg1: i32, %arg2: i32) -> (i32, i32) {
    %c0_i32 = arith.constant 0 : i32
    return %arg0, %arg1 : i32, i32
  }
}

</mosaic_0001>

<llo_original>
// kernel: tpu_custom_call.1
$region0: #{tpu_custom_call.1}
  #allocation0 [shape = 'u32[]', space=smem, size = 0x4, offset = 0x4, fixed_abs, tag = 'smem constant byte address 0x4 - core index']
  #allocation1 [shape = 'u32[144,128]{1,0:T(1,128)}', space=vmem, size = 0x12000, scoped, tag = 'internal scratch']
  #allocation2 [shape = 'f32[80,128]{1,0:T(8,128)}', space=vmem, size = 0xa000, scoped, tag = 'scratch operand']
  %s0 = inlined_call_operand.hbm [shape: bf16[80,128], index: 0, kind: input, shape index: {}]
  %s1 = inlined_call_operand.hbm [shape: bf16[128,128], index: 1, kind: input, shape index: {}]
  %s2 = inlined_call_operand.vmem [shape: f32[1,128], index: 2, kind: input, shape index: {}]
  %s3 = inlined_call_operand.hbm [shape: f32[80,128], index: 3, kind: output, shape index: {}]
  %s4 = sld [smem:[#allocation0]]
  $region38: #{tpu_custom_call.1} parent=0
    _
  %s6 = ssub.s32 1, %s4
  %s7 = scalar_select 0, %s6, %s4
  $region1: #{tpu_custom_call.1} parent=0
    #allocation3 [shape = 'u8[20480]{0}', space=vmem, size = 0x5000, scoped, tag = 'input window, operand 0, single buffered']
    #allocation4 [shape = 's32[1]{0}', space=sflag, size = 0x4, scoped, tag = 'scoped memory for tpu_custom_call.1']
    #allocation5 [shape = 's32[1]{0}', space=sflag, size = 0x4, scoped, tag = 'scoped memory for tpu_custom_call.1']
    #allocation6 [shape = 'u8[32768]{0}', space=vmem, size = 0x8000, scoped, tag = 'input window, operand 1, single buffered']
    #allocation7 [shape = 's32[1]{0}', space=sflag, size = 0x4, scoped, tag = 'scoped memory for tpu_custom_call.1']
    #allocation8 [shape = 'u8[40960]{0}', space=vmem, size = 0xa000, scoped, tag = 'output window, operand 0, single buffered']
    %8 = vsyncpa [#allocation4], 0
    %9 = vsyncpa [#allocation7], 0
    %10 = vsyncpa [#allocation5], 0
    // Predicated region
    $region2: #{tpu_custom_call.1} parent=1 // pred_check
      _
    $region3: #{tpu_custom_call.1} parent=1 // pred_check_branch
      %12 = sbr.rel (0) target = $region5
    $region4: #{tpu_custom_call.1} parent=1 // pred_region
      %s14 = ssub.s32 640, 640
      %15 = vsyncadd [#allocation4], %s14
      %s16 = sshll.u32 [#allocation3], 4
      %s17 = int_to_ptr.vmem [resolvable:$true] %s16
      %22 = dma.hbm_to_vmem [thread:$0]  %s0, 640, %s17, [#allocation4], 64, 64, 4
    $region5: #{tpu_custom_call.1} parent=1 // pred_fallthru
      _
    // Predicated region
    $region6: #{tpu_custom_call.1} parent=1 // pred_check
      _
    $region7: #{tpu_custom_call.1} parent=1 // pred_check_branch
      %24 = sbr.rel (0) target = $region9
    $region8: #{tpu_custom_call.1} parent=1 // pred_region
      %s26 = ssub.s32 1024, 1024
      %27 = vsyncadd [#allocation7], %s26
      %s28 = sshll.u32 [#allocation6], 4
      %s29 = int_to_ptr.vmem [resolvable:$true] %s28
      %34 = dma.hbm_to_vmem [thread:$0]  %s1, 1024, %s29, [#allocation7], 64, 64, 4
    $region9: #{tpu_custom_call.1} parent=1 // pred_fallthru
      _
    // Predicated region
    $region10: #{tpu_custom_call.1} parent=1 // pred_check
      _
    $region11: #{tpu_custom_call.1} parent=1 // pred_check_branch
      %36 = sbr.rel (0) target = $region13
    $region12: #{tpu_custom_call.1} parent=1 // pred_region
      _
    $region13: #{tpu_custom_call.1} parent=1 // pred_fallthru
      _
    // Predicated region
    $region14: #{tpu_custom_call.1} parent=1 // pred_check
      _
    $region15: #{tpu_custom_call.1} parent=1 // pred_check_branch
      %38 = sbr.rel (0) target = $region17
    $region16: #{tpu_custom_call.1} parent=1 // pred_region
      %39 = dma.done [#allocation4], 640
    $region17: #{tpu_custom_call.1} parent=1 // pred_fallthru
      _
    // Predicated region
    $region18: #{tpu_custom_call.1} parent=1 // pred_check
      _
    $region19: #{tpu_custom_call.1} parent=1 // pred_check_branch
      %41 = sbr.rel (0) target = $region21
    $region20: #{tpu_custom_call.1} parent=1 // pred_region
      %42 = dma.done [#allocation7], 1024
    $region21: #{tpu_custom_call.1} parent=1 // pred_fallthru
      _
    %p44 = scmp.eq.s32.totalorder 0, 0
    // Predicated region
    $region22: #{tpu_custom_call.1} parent=1 // pred_check
      %p45 = pneg %p44
    $region23: #{tpu_custom_call.1} parent=1 // pred_check_branch
      %47 = sbr.rel (%p45) target = $region25
    $region24: #{tpu_custom_call.1} parent=1 // pred_region
      %48 = vst [vmem:[#allocation2] sm:$0xff] 0.0
      %49 = vst [vmem:[#allocation2 + $0x8] sm:$0xff] 0.0
      %50 = vst [vmem:[#allocation2 + $0x10] sm:$0xff] 0.0
      %51 = vst [vmem:[#allocation2 + $0x18] sm:$0xff] 0.0
      %52 = vst [vmem:[#allocation2 + $0x20] sm:$0xff] 0.0
      %53 = vst [vmem:[#allocation2 + $0x28] sm:$0xff] 0.0
      %54 = vst [vmem:[#allocation2 + $0x30] sm:$0xff] 0.0
      %55 = vst [vmem:[#allocation2 + $0x38] sm:$0xff] 0.0
      %56 = vst [vmem:[#allocation2 + $0x40] sm:$0xff] 0.0
      %57 = vst [vmem:[#allocation2 + $0x48] sm:$0xff] 0.0
    $region25: #{tpu_custom_call.1} parent=1 // pred_fallthru
      _
    %v58 = vld [vmem:[#allocation2] sm:$0xff]
    %v59 = vld [vmem:[#allocation2 + $0x8] sm:$0xff]
    %v60 = vld [vmem:[#allocation2 + $0x10] sm:$0xff]
    %v61 = vld [vmem:[#allocation2 + $0x18] sm:$0xff]
    %v62 = vld [vmem:[#allocation2 + $0x20] sm:$0xff]
    %v63 = vld [vmem:[#allocation2 + $0x28] sm:$0xff]
    %v64 = vld [vmem:[#allocation2 + $0x30] sm:$0xff]
    %v65 = vld [vmem:[#allocation2 + $0x38] sm:$0xff]
    %v66 = vld [vmem:[#allocation2 + $0x40] sm:$0xff]
    %v67 = vld [vmem:[#allocation2 + $0x48] sm:$0xff]
    %v68 = vld [vmem:[#allocation3] sm:$0xf]
    %v69 = vld [vmem:[#allocation3 + $0x4] sm:$0xf]
    %v70 = vld [vmem:[#allocation3 + $0x8] sm:$0xf]
    %v71 = vld [vmem:[#allocation3 + $0xc] sm:$0xf]
    %v72 = vld [vmem:[#allocation3 + $0x10] sm:$0xf]
    %v73 = vld [vmem:[#allocation3 + $0x14] sm:$0xf]
    %v74 = vld [vmem:[#allocation3 + $0x18] sm:$0xf]
    %v75 = vld [vmem:[#allocation3 + $0x1c] sm:$0xf]
    %v76 = vld [vmem:[#allocation3 + $0x20] sm:$0xf]
    %v77 = vld [vmem:[#allocation3 + $0x24] sm:$0xf]
    %v78 = vld [vmem:[#allocation6] sm:$0xf]
    %v79 = vld [vmem:[#allocation6 + $0x4] sm:$0xf]
    %v80 = vld [vmem:[#allocation6 + $0x8] sm:$0xf]
    %v81 = vld [vmem:[#allocation6 + $0xc] sm:$0xf]
    %v82 = vld [vmem:[#allocation6 + $0x10] sm:$0xf]
    %v83 = vld [vmem:[#allocation6 + $0x14] sm:$0xf]
    %v84 = vld [vmem:[#allocation6 + $0x18] sm:$0xf]
    %v85 = vld [vmem:[#allocation6 + $0x1c] sm:$0xf]
    %v86 = vld [vmem:[#allocation6 + $0x20] sm:$0xf]
    %v87 = vld [vmem:[#allocation6 + $0x24] sm:$0xf]
    %v88 = vld [vmem:[#allocation6 + $0x28] sm:$0xf]
    %v89 = vld [vmem:[#allocation6 + $0x2c] sm:$0xf]
    %v90 = vld [vmem:[#allocation6 + $0x30] sm:$0xf]
    %v91 = vld [vmem:[#allocation6 + $0x34] sm:$0xf]
    %v92 = vld [vmem:[#allocation6 + $0x38] sm:$0xf]
    %v93 = vld [vmem:[#allocation6 + $0x3c] sm:$0xf]
    %v104 = vunpack.c.l.b16 %v68
    %v105 = vunpack.c.l.b16 %v69
    %v106 = vunpack.c.l.b16 %v70
    %v107 = vunpack.c.l.b16 %v71
    %v108 = vunpack.c.l.b16 %v72
    %v109 = vunpack.c.l.b16 %v73
    %v110 = vunpack.c.l.b16 %v74
    %v111 = vunpack.c.l.b16 %v75
    %v112 = vunpack.c.l.b16 %v76
    %v113 = vunpack.c.l.b16 %v77
    %v114 = vpack.c.b16 %v105, %v104
    %v115 = vpack.c.b16 %v107, %v106
    %v116 = vpack.c.b16 %v109, %v108
    %v117 = vpack.c.b16 %v111, %v110
    %v118 = vpack.c.b16 %v113, %v112
    %v140 = vunpack.c.l.b16 %v78
    %v141 = vunpack.c.l.b16 %v79
    %v142 = vunpack.c.l.b16 %v80
    %v143 = vunpack.c.l.b16 %v81
    %v144 = vunpack.c.l.b16 %v82
    %v145 = vunpack.c.l.b16 %v83
    %v146 = vunpack.c.l.b16 %v84
    %v147 = vunpack.c.l.b16 %v85
    %v148 = vunpack.c.l.b16 %v86
    %v149 = vunpack.c.l.b16 %v87
    %v150 = vunpack.c.l.b16 %v88
    %v151 = vunpack.c.l.b16 %v89
    %v152 = vunpack.c.l.b16 %v90
    %v153 = vunpack.c.l.b16 %v91
    %v154 = vunpack.c.l.b16 %v92
    %v155 = vunpack.c.l.b16 %v93
    %v156 = vpack.c.b16 %v141, %v140
    %v157 = vpack.c.b16 %v143, %v142
    %v158 = vpack.c.b16 %v145, %v144
    %v159 = vpack.c.b16 %v147, %v146
    %v160 = vpack.c.b16 %v149, %v148
    %v161 = vpack.c.b16 %v151, %v150
    %v162 = vpack.c.b16 %v153, %v152
    %v163 = vpack.c.b16 %v155, %v154
    %172 = vmatprep.subr.bf16.mxu0 0
    %173 = vmatpush1.bf16.msra.mxu0 %v163
    %174 = vmatprep.subr.bf16.mxu0 0
    %175 = vmatpush1.bf16.msra.mxu0 %v162
    %176 = vmatprep.subr.bf16.mxu0 0
    %177 = vmatpush1.bf16.msra.mxu0 %v161
    %178 = vmatprep.subr.bf16.mxu0 0
    %179 = vmatpush1.bf16.msra.mxu0 %v160
    %180 = vmatprep.subr.bf16.mxu0 0
    %181 = vmatpush1.bf16.msra.mxu0 %v159
    %182 = vmatprep.subr.bf16.mxu0 0
    %183 = vmatpush1.bf16.msra.mxu0 %v158
    %184 = vmatprep.subr.bf16.mxu0 0
    %185 = vmatpush1.bf16.msra.mxu0 %v157
    %186 = vmatprep.subr.bf16.mxu0 0
    %187 = vmatpush1.bf16.msra.mxu0 %v156
    %188 = vmatprep.subr.bf16.mxu0 0
    %189 = vmatpush2.bf16.msra.mxu0 0
    %190 = vmatprep.subr.bf16.mxu0 0
    %191 = vmatpush2.bf16.msra.mxu0 0
    %192 = vmatprep.subr.bf16.mxu0 0
    %193 = vmatpush2.bf16.msra.mxu0 0
    %194 = vmatprep.subr.bf16.mxu0 0
    %195 = vmatpush2.bf16.msra.mxu0 0
    %196 = vmatprep.subr.bf16.mxu0 0
    %197 = vmatpush2.bf16.msra.mxu0 0
    %198 = vmatprep.subr.bf16.mxu0 0
    %199 = vmatpush2.bf16.msra.mxu0 0
    %200 = vmatprep.subr.bf16.mxu0 0
    %201 = vmatpush2.bf16.msra.mxu0 0
    %202 = vmatprep.subr.bf16.mxu0 0
    %203 = vmatpush2.bf16.msra.mxu0 0
    %204 = vmatprep.mubr.bf16.mxu0 0
    %205 = vmatmul.mubr.bf16.gmra.mxu0 %v114
    %v206 = vpop.f32.mrf.mxu0
    %v207 = vadd.f32 0.0, %v206
    %v208 = vpop.f32.mrf.mxu0
    %v209 = vpop.f32.mrf.mxu0
    %v210 = vadd.f32 0.0, %v209
    %v211 = vpop.f32.mrf.mxu0
    %212 = vmatprep.mubr.bf16.mxu0 0
    %213 = vmatmul.mubr.bf16.gmra.mxu0 %v115
    %v214 = vpop.f32.mrf.mxu0
    %v215 = vadd.f32 0.0, %v214
    %v216 = vpop.f32.mrf.mxu0
    %v217 = vpop.f32.mrf.mxu0
    %v218 = vadd.f32 0.0, %v217
    %v219 = vpop.f32.mrf.mxu0
    %220 = vmatprep.mubr.bf16.mxu0 0
    %221 = vmatmul.mubr.bf16.gmra.mxu0 %v116
    %v222 = vpop.f32.mrf.mxu0
    %v223 = vadd.f32 0.0, %v222
    %v224 = vpop.f32.mrf.mxu0
    %v225 = vpop.f32.mrf.mxu0
    %v226 = vadd.f32 0.0, %v225
    %v227 = vpop.f32.mrf.mxu0
    %228 = vmatprep.mubr.bf16.mxu0 0
    %229 = vmatmul.mubr.bf16.gmra.mxu0 %v117
    %v230 = vpop.f32.mrf.mxu0
    %v231 = vadd.f32 0.0, %v230
    %v232 = vpop.f32.mrf.mxu0
    %v233 = vpop.f32.mrf.mxu0
    %v234 = vadd.f32 0.0, %v233
    %v235 = vpop.f32.mrf.mxu0
    %236 = vmatprep.mubr.bf16.mxu0 0
    %237 = vmatmul.mubr.bf16.gmra.mxu0 %v118
    %v238 = vpop.f32.mrf.mxu0
    %v239 = vadd.f32 0.0, %v238
    %v240 = vpop.f32.mrf.mxu0
    %v241 = vpop.f32.mrf.mxu0
    %v242 = vadd.f32 0.0, %v241
    %v243 = vpop.f32.mrf.mxu0
    %244 = vdwg.mxu0
    %v245 = vadd.f32 %v58, %v207
    %v246 = vadd.f32 %v59, %v210
    %v247 = vadd.f32 %v60, %v215
    %v248 = vadd.f32 %v61, %v218
    %v249 = vadd.f32 %v62, %v223
    %v250 = vadd.f32 %v63, %v226
    %v251 = vadd.f32 %v64, %v231
    %v252 = vadd.f32 %v65, %v234
    %v253 = vadd.f32 %v66, %v239
    %v254 = vadd.f32 %v67, %v242
    %255 = vst [vmem:[#allocation2] sm:$0xff] %v245
    %256 = vst [vmem:[#allocation2 + $0x8] sm:$0xff] %v246
    %257 = vst [vmem:[#allocation2 + $0x10] sm:$0xff] %v247
    %258 = vst [vmem:[#allocation2 + $0x18] sm:$0xff] %v248
    %259 = vst [vmem:[#allocation2 + $0x20] sm:$0xff] %v249
    %260 = vst [vmem:[#allocation2 + $0x28] sm:$0xff] %v250
    %261 = vst [vmem:[#allocation2 + $0x30] sm:$0xff] %v251
    %262 = vst [vmem:[#allocation2 + $0x38] sm:$0xff] %v252
    %263 = vst [vmem:[#allocation2 + $0x40] sm:$0xff] %v253
    %264 = vst [vmem:[#allocation2 + $0x48] sm:$0xff] %v254
    // Predicated region
    $region26: #{tpu_custom_call.1} parent=1 // pred_check
      %p265 = pneg %p44
    $region27: #{tpu_custom_call.1} parent=1 // pred_check_branch
      %267 = sbr.rel (%p265) target = $region29
    $region28: #{tpu_custom_call.1} parent=1 // pred_region
      %v268 = vld [vmem:[#allocation2] sm:$0xff]
      %v269 = vld [vmem:[#allocation2 + $0x8] sm:$0xff]
      %v270 = vld [vmem:[#allocation2 + $0x10] sm:$0xff]
      %v271 = vld [vmem:[#allocation2 + $0x18] sm:$0xff]
      %v272 = vld [vmem:[#allocation2 + $0x20] sm:$0xff]
      %v273 = vld [vmem:[#allocation2 + $0x28] sm:$0xff]
      %v274 = vld [vmem:[#allocation2 + $0x30] sm:$0xff]
      %v275 = vld [vmem:[#allocation2 + $0x38] sm:$0xff]
      %v276 = vld [vmem:[#allocation2 + $0x40] sm:$0xff]
      %v277 = vld [vmem:[#allocation2 + $0x48] sm:$0xff]
      %v278 = vld [vmem:[%s2] sm:$0x1]
      %v280 = vlaneseq
      %v281 = vshrl.u32 %v280, 7
      %v282 = vsub.s32 0, %v281
      %v283 = vrot.slane %v278, %v282
      %v285 = vadd.f32 %v268, %v283
      %v286 = vadd.f32 %v269, %v283
      %v287 = vadd.f32 %v270, %v283
      %v288 = vadd.f32 %v271, %v283
      %v289 = vadd.f32 %v272, %v283
      %v290 = vadd.f32 %v273, %v283
      %v291 = vadd.f32 %v274, %v283
      %v292 = vadd.f32 %v275, %v283
      %v293 = vadd.f32 %v276, %v283
      %v294 = vadd.f32 %v277, %v283
      %295 = vst [vmem:[#allocation8] sm:$0xff] %v285
      %296 = vst [vmem:[#allocation8 + $0x8] sm:$0xff] %v286
      %297 = vst [vmem:[#allocation8 + $0x10] sm:$0xff] %v287
      %298 = vst [vmem:[#allocation8 + $0x18] sm:$0xff] %v288
      %299 = vst [vmem:[#allocation8 + $0x20] sm:$0xff] %v289
      %300 = vst [vmem:[#allocation8 + $0x28] sm:$0xff] %v290
      %301 = vst [vmem:[#allocation8 + $0x30] sm:$0xff] %v291
      %302 = vst [vmem:[#allocation8 + $0x38] sm:$0xff] %v292
      %303 = vst [vmem:[#allocation8 + $0x40] sm:$0xff] %v293
      %304 = vst [vmem:[#allocation8 + $0x48] sm:$0xff] %v294
    $region29: #{tpu_custom_call.1} parent=1 // pred_fallthru
      _
    // Predicated region
    $region30: #{tpu_custom_call.1} parent=1 // pred_check
      _
    $region31: #{tpu_custom_call.1} parent=1 // pred_check_branch
      %306 = sbr.rel (0) target = $region33
    $region32: #{tpu_custom_call.1} parent=1 // pred_region
      %s308 = ssub.s32 1280, 1280
      %309 = vsyncadd [#allocation5], %s308
      %s310 = sshll.u32 [#allocation8], 4
      %s311 = int_to_ptr.vmem [resolvable:$true] %s310
      %316 = dma.vmem_to_hbm [thread:$0]  %s311, 1280, %s3, [#allocation5], 128, 128, 8
    $region33: #{tpu_custom_call.1} parent=1 // pred_fallthru
      _
    // Predicated region
    $region34: #{tpu_custom_call.1} parent=1 // pred_check
      _
    $region35: #{tpu_custom_call.1} parent=1 // pred_check_branch
      %318 = sbr.rel (0) target = $region37
    $region36: #{tpu_custom_call.1} parent=1 // pred_region
      %319 = dma.done [#allocation5], 1280
    $region37: #{tpu_custom_call.1} parent=1 // pred_fallthru
      _
    %320 = vsyncpa [#allocation4], 1
    %321 = vsyncpa [#allocation7], 1
    %322 = vsyncpa [#allocation5], 1

</llo_original>
